<compile_context>
chip_gen: v6e
topology: v6e:2x2x1
jax: 0.10.0
libtpu: 0.0.40
codegen_flags: <defaults>
</compile_context>

<pallas_src>
import jax
import jax.numpy as jnp
from jax.experimental import pallas as pl
from jax.experimental.pallas import tpu as pltpu


# ---------------------------------------------------------------------------
# Kernel: one tile of rows.
#   out = relu(x1 @ W1a + x2 @ W1b + b1) @ W2 + b2
# Weights arrive pre-split / pre-transposed ((in, out) layout): no concats,
# no transposes inside the kernel.
# ---------------------------------------------------------------------------
def merge_kernel(x1_ref, x2_ref, w1a_ref, w1b_ref, b1_ref, w2_ref, b2_ref,
                 out_ref):
    f32 = jnp.float32
    cd = w1a_ref.dtype                       # compute dtype for MXU operands
    x1 = x1_ref[...].astype(cd)              # no-op cast when dtypes match
    x2 = x2_ref[...].astype(cd)
    h = jnp.dot(x1, w1a_ref[...], preferred_element_type=f32)
    h = h + jnp.dot(x2, w1b_ref[...], preferred_element_type=f32)
    h = jnp.maximum(h + b1_ref[...], 0.0)                       # relu, f32
    out = jnp.dot(h.astype(w2_ref.dtype), w2_ref[...],
                  preferred_element_type=f32) + b2_ref[...]
    out_ref[...] = out.astype(out_ref.dtype)


# ---------------------------------------------------------------------------
# One-time (init-time) weight preparation: split W1 by input block, transpose
# everything to (in, out) layout, reshape biases, optional compute-dtype cast.
# ---------------------------------------------------------------------------
def prepare_merge_params(params, dim1, *, compute_dtype=jnp.float32):
    """params = (w1, b1, w2, b2) in PyTorch Linear layout:
         w1: (dim3, dim1+dim2), b1: (dim3,), w2: (dim4, dim3), b2: (dim4,)"""
    w1, b1, w2, b2 = params
    dim3 = w1.shape[0]
    dim4 = w2.shape[0]
    w1a = jnp.asarray(w1[:, :dim1].T, compute_dtype)            # (dim1, dim3)
    w1b = jnp.asarray(w1[:, dim1:].T, compute_dtype)            # (dim2, dim3)
    w2t = jnp.asarray(w2.T, compute_dtype)                      # (dim3, dim4)
    b1r = jnp.asarray(b1, jnp.float32).reshape(1, dim3)
    b2r = jnp.asarray(b2, jnp.float32).reshape(1, dim4)
    return (w1a, w1b, b1r, w2t, b2r)


def _round_up(x, m):
    return ((x + m - 1) // m) * m


# ---------------------------------------------------------------------------
# Wrapper: tile selection + pallas_call (no input padding, no output slicing).
# ---------------------------------------------------------------------------
def merge_layer(x1, x2, prepared, *, tile_n=None, max_tile_n=4096):
    w1a, w1b, b1r, w2t, b2r = prepared
    n, dim1 = x1.shape
    dim2 = x2.shape[-1]
    dim3 = w1a.shape[-1]
    dim4 = w2t.shape[-1]

    if tile_n is None:
        # Large tiles for HBM efficiency, but keep ~8 grid steps at large N so
        # both v7x TensorCores (and the DMA pipeline) have parallel work.
        tile_n = min(max_tile_n, max(8, _round_up(pl.cdiv(n, 8), 8)))
    # Block sublane dim must be a multiple of 8; no point exceeding the array.
    tile_n = min(_round_up(tile_n, 8), _round_up(n, 8))

    grid = (pl.cdiv(n, tile_n),)             # partial last block is masked
    out_dtype = x1.dtype

    def _param(shape):
        return pl.BlockSpec(shape, lambda *_: (0,) * len(shape))

    in_specs = [
        pl.BlockSpec((tile_n, dim1), lambda i: (i, 0)),   # x1 row tile
        pl.BlockSpec((tile_n, dim2), lambda i: (i, 0)),   # x2 row tile
        _param(w1a.shape), _param(w1b.shape), _param(b1r.shape),
        _param(w2t.shape), _param(b2r.shape),
    ]
    out_spec = pl.BlockSpec((tile_n, dim4), lambda i: (i, 0))

    itemsize = jnp.dtype(x1.dtype).itemsize
    cd_itemsize = jnp.dtype(w1a.dtype).itemsize
    cost = pl.CostEstimate(
        flops=2 * n * (dim1 + dim2) * dim3 + 2 * n * dim3 * dim4,
        transcendentals=0,
        bytes_accessed=(n * (dim1 + dim2) * itemsize                 # x1, x2
                        + n * dim4 * jnp.dtype(out_dtype).itemsize   # out
                        + ((dim1 + dim2) * dim3 + dim3 * dim4) * cd_itemsize
                        + (dim3 + dim4) * 4),                        # weights
    )

    return pl.pallas_call(
        merge_kernel,
        out_shape=jax.ShapeDtypeStruct((n, dim4), out_dtype),
        grid=grid,
        in_specs=in_specs,
        out_specs=out_spec,
        compiler_params=pltpu.CompilerParams(
            dimension_semantics=("parallel",)),
        cost_estimate=cost,
    )(x1, x2, w1a, w1b, b1r, w2t, b2r)


# ---------------------------------------------------------------------------
# Pure-JAX reference (mirrors the PyTorch forward exactly).
# ---------------------------------------------------------------------------
def merge_layer_ref(x1, x2, params):
    w1, b1, w2, b2 = params
    h = jnp.concatenate([x1, x2], axis=1)
    h = jnp.maximum(h @ w1.T + b1, 0.0)
    return h @ w2.T + b2


def xavier_normal(key, shape):
    fan_out, fan_in = shape
    std = (2.0 / (fan_in + fan_out)) ** 0.5
    return std * jax.random.normal(key, shape, jnp.float32)


if __name__ == "__main__":
    # Small shapes consistent with MergeLayer(dim1, dim2, dim3, dim4, dropout).
    N = 250          # NOT a multiple of the tile -> exercises partial block
    DIM1 = 16
    DIM2 = 24
    DIM3 = 32
    DIM4 = 16

    key = jax.random.PRNGKey(0)
    k_x1, k_x2, k_w1, k_b1, k_w2, k_b2 = jax.random.split(key, 6)

    x1 = jax.random.normal(k_x1, (N, DIM1), jnp.float32)
    x2 = jax.random.normal(k_x2, (N, DIM2), jnp.float32)

    w1 = xavier_normal(k_w1, (DIM3, DIM1 + DIM2))
    b1 = 0.05 * jax.random.normal(k_b1, (DIM3,), jnp.float32)
    w2 = xavier_normal(k_w2, (DIM4, DIM3))
    b2 = 0.05 * jax.random.normal(k_b2, (DIM4,), jnp.float32)
    params = (w1, b1, w2, b2)

    # One-time weight prep (would live at parameter-init time in a model).
    prepared = prepare_merge_params(params, DIM1, compute_dtype=jnp.float32)

    out = merge_layer(x1, x2, prepared)      # auto tile_n, partial last block
    out = jax.block_until_ready(out)

    ref = merge_layer_ref(x1, x2, params)
    assert out.shape == (N, DIM4) and out.dtype == jnp.float32
    assert jnp.max(jnp.abs(out - ref)) < 1e-4, "mismatch vs reference"
    print("KERNEL_OK")
</pallas_src>

<mosaic_0001>
module attributes {stable_mosaic.version = 11 : i64} {
  func.func @merge_kernel(%arg0: i32, %arg1: memref<32x16xf32, #tpu.memory_space<vmem>>, %arg2: memref<32x24xf32, #tpu.memory_space<vmem>>, %arg3: memref<16x32xf32, #tpu.memory_space<vmem>>, %arg4: memref<24x32xf32, #tpu.memory_space<vmem>>, %arg5: memref<1x32xf32, #tpu.memory_space<vmem>>, %arg6: memref<32x16xf32, #tpu.memory_space<vmem>>, %arg7: memref<1x16xf32, #tpu.memory_space<vmem>>, %arg8: memref<32x16xf32, #tpu.memory_space<vmem>>) attributes {dimension_semantics = [#tpu.dimension_semantics<parallel>], iteration_bounds = array<i64: 8>, scalar_prefetch = 0 : i64, scratch_operands = 0 : i64, tpu.core_type = #tpu.core_type<tc>, window_params = [{transform_indices = @transform_0, window_bounds = array<i64: 32, 16>}, {transform_indices = @transform_1, window_bounds = array<i64: 32, 24>}, {pipeline_mode = #tpu.pipeline_mode<synchronous>, transform_indices = @transform_2, window_bounds = array<i64: 16, 32>}, {pipeline_mode = #tpu.pipeline_mode<synchronous>, transform_indices = @transform_3, window_bounds = array<i64: 24, 32>}, {pipeline_mode = #tpu.pipeline_mode<synchronous>, transform_indices = @transform_4, window_bounds = array<i64: 1, 32>}, {pipeline_mode = #tpu.pipeline_mode<synchronous>, transform_indices = @transform_5, window_bounds = array<i64: 32, 16>}, {pipeline_mode = #tpu.pipeline_mode<synchronous>, transform_indices = @transform_6, window_bounds = array<i64: 1, 16>}, {transform_indices = @transform_7, window_bounds = array<i64: 32, 16>}]} {
    %c0 = arith.constant 0 : index
    %c0_0 = arith.constant 0 : index
    %0 = vector.load %arg1[%c0, %c0_0] : memref<32x16xf32, #tpu.memory_space<vmem>>, vector<32x16xf32>
    %c0_1 = arith.constant 0 : index
    %c0_2 = arith.constant 0 : index
    %1 = vector.load %arg2[%c0_1, %c0_2] : memref<32x24xf32, #tpu.memory_space<vmem>>, vector<32x24xf32>
    %c0_3 = arith.constant 0 : index
    %c0_4 = arith.constant 0 : index
    %2 = vector.load %arg3[%c0_3, %c0_4] : memref<16x32xf32, #tpu.memory_space<vmem>>, vector<16x32xf32>
    %cst = arith.constant dense<0.000000e+00> : vector<32x32xf32>
    %3 = tpu.matmul %0, %2, %cst {dimension_numbers = #tpu.dot_dimension_numbers<[1], [0], [0], [1], [0, 0, 1, 1], [], []>} : vector<32x16xf32>, vector<16x32xf32>, vector<32x32xf32> -> vector<32x32xf32>
    %c0_5 = arith.constant 0 : index
    %c0_6 = arith.constant 0 : index
    %4 = vector.load %arg4[%c0_5, %c0_6] : memref<24x32xf32, #tpu.memory_space<vmem>>, vector<24x32xf32>
    %cst_7 = arith.constant dense<0.000000e+00> : vector<32x32xf32>
    %5 = tpu.matmul %1, %4, %cst_7 {dimension_numbers = #tpu.dot_dimension_numbers<[1], [0], [0], [1], [0, 0, 1, 1], [], []>} : vector<32x24xf32>, vector<24x32xf32>, vector<32x32xf32> -> vector<32x32xf32>
    %6 = arith.addf %3, %5 : vector<32x32xf32>
    %c0_8 = arith.constant 0 : index
    %c0_9 = arith.constant 0 : index
    %7 = vector.load %arg5[%c0_8, %c0_9] : memref<1x32xf32, #tpu.memory_space<vmem>>, vector<1x32xf32>
    %8 = vector.broadcast %7 : vector<1x32xf32> to vector<32x32xf32>
    %9 = arith.addf %6, %8 : vector<32x32xf32>
    %cst_10 = arith.constant 0.000000e+00 : f32
    %10 = vector.broadcast %cst_10 : f32 to vector<32x32xf32>
    %11 = arith.maximumf %9, %10 : vector<32x32xf32>
    %c0_11 = arith.constant 0 : index
    %c0_12 = arith.constant 0 : index
    %12 = vector.load %arg6[%c0_11, %c0_12] : memref<32x16xf32, #tpu.memory_space<vmem>>, vector<32x16xf32>
    %cst_13 = arith.constant dense<0.000000e+00> : vector<32x16xf32>
    %13 = tpu.matmul %11, %12, %cst_13 {dimension_numbers = #tpu.dot_dimension_numbers<[1], [0], [0], [1], [0, 0, 1, 1], [], []>} : vector<32x32xf32>, vector<32x16xf32>, vector<32x16xf32> -> vector<32x16xf32>
    %c0_14 = arith.constant 0 : index
    %c0_15 = arith.constant 0 : index
    %14 = vector.load %arg7[%c0_14, %c0_15] : memref<1x16xf32, #tpu.memory_space<vmem>>, vector<1x16xf32>
    %15 = vector.broadcast %14 : vector<1x16xf32> to vector<32x16xf32>
    %16 = arith.addf %13, %15 : vector<32x16xf32>
    %c0_16 = arith.constant 0 : index
    %c0_17 = arith.constant 0 : index
    %17 = vector.load %arg8[%c0_16, %c0_17] : memref<32x16xf32, #tpu.memory_space<vmem>>, vector<32x16xf32>
    tpu.vector_store %arg8[%c0_16, %c0_17], %16 {strides = array<i32>} : memref<32x16xf32, #tpu.memory_space<vmem>>, vector<32x16xf32>,
    return
  }
  func.func @transform_0(%arg0: i32) -> (i32, i32) {
    %c0_i32 = arith.constant 0 : i32
    %c0_i32_0 = arith.constant 0 : i32
    return %arg0, %c0_i32 : i32, i32
  }
  func.func @transform_1(%arg0: i32) -> (i32, i32) {
    %c0_i32 = arith.constant 0 : i32
    %c0_i32_0 = arith.constant 0 : i32
    return %arg0, %c0_i32 : i32, i32
  }
  func.func @transform_2(%arg0: i32) -> (i32, i32) {
    %c0_i32 = arith.constant 0 : i32
    %c0_i32_0 = arith.constant 0 : i32
    %c0_i32_1 = arith.constant 0 : i32
    return %c0_i32, %c0_i32_0 : i32, i32
  }
  func.func @transform_3(%arg0: i32) -> (i32, i32) {
    %c0_i32 = arith.constant 0 : i32
    %c0_i32_0 = arith.constant 0 : i32
    %c0_i32_1 = arith.constant 0 : i32
    return %c0_i32, %c0_i32_0 : i32, i32
  }
  func.func @transform_4(%arg0: i32) -> (i32, i32) {
    %c0_i32 = arith.constant 0 : i32
    %c0_i32_0 = arith.constant 0 : i32
    %c0_i32_1 = arith.constant 0 : i32
    return %c0_i32, %c0_i32_0 : i32, i32
  }
  func.func @transform_5(%arg0: i32) -> (i32, i32) {
    %c0_i32 = arith.constant 0 : i32
    %c0_i32_0 = arith.constant 0 : i32
    %c0_i32_1 = arith.constant 0 : i32
    return %c0_i32, %c0_i32_0 : i32, i32
  }
  func.func @transform_6(%arg0: i32) -> (i32, i32) {
    %c0_i32 = arith.constant 0 : i32
    %c0_i32_0 = arith.constant 0 : i32
    %c0_i32_1 = arith.constant 0 : i32
    return %c0_i32, %c0_i32_0 : i32, i32
  }
  func.func @transform_7(%arg0: i32) -> (i32, i32) {
    %c0_i32 = arith.constant 0 : i32
    %c0_i32_0 = arith.constant 0 : i32
    return %arg0, %c0_i32 : i32, i32
  }
}

</mosaic_0001>

<llo_original>
// kernel: tpu_custom_call.1
$region0: #{tpu_custom_call.1}
  #allocation0 [shape = 'u32[]', space=smem, size = 0x4, offset = 0x4, fixed_abs, tag = 'smem constant byte address 0x4 - core index']
  #allocation1 [shape = 'u32[144,128]{1,0:T(1,128)}', space=vmem, size = 0x12000, scoped, tag = 'internal scratch']
  %s0 = inlined_call_operand.vmem [shape: f32[250,16], index: 0, kind: input, shape index: {}]
  %s1 = inlined_call_operand.vmem [shape: f32[250,24], index: 1, kind: input, shape index: {}]
  %s2 = inlined_call_operand.vmem [shape: f32[16,32], index: 2, kind: input, shape index: {}]
  %s3 = inlined_call_operand.vmem [shape: f32[24,32], index: 3, kind: input, shape index: {}]
  %s4 = inlined_call_operand.vmem [shape: f32[1,32], index: 4, kind: input, shape index: {}]
  %s5 = inlined_call_operand.vmem [shape: f32[32,16], index: 5, kind: input, shape index: {}]
  %s6 = inlined_call_operand.vmem [shape: f32[1,16], index: 6, kind: input, shape index: {}]
  %s7 = inlined_call_operand.vmem [shape: f32[250,16], index: 7, kind: output, shape index: {}]
  %s8 = sld [smem:[#allocation0]]
  $region61: #{tpu_custom_call.1} parent=0
    _
  %s10 = ssub.s32 1, %s8
  %s11 = scalar_select 0, %s10, %s8
  loop: start=0, step=1, limit=10
  $region2: #{tpu_custom_call.1} parent=0 // loop_pre_header
    _
  $region3: #{tpu_custom_call.1} parent=0 // loop_header
    %s13 = sphi 0, %s17
    %p14 = scmp.ge.s32.totalorder %s13, 10
    %s23 = sphi 0, %s25
    %s26 = sphi 0, %s23
    %s27 = sphi 0, %s26
    %s43 = sphi 0, %s27
    %s49 = sphi 0, %s51
    %s52 = sphi 0, %s49
    %s53 = sphi 0, %s52
    %s69 = sphi 0, %s53
    %s73 = sphi 0, %s73
    %s75 = sphi 0, %s73
    %s76 = sphi 0, %s75
    %s90 = sphi 0, %s76
    %s94 = sphi 0, %s94
    %s96 = sphi 0, %s94
    %s97 = sphi 0, %s96
    %s111 = sphi 0, %s97
    %s115 = sphi 0, %s115
    %s117 = sphi 0, %s115
    %s118 = sphi 0, %s117
    %s132 = sphi 0, %s118
    %s136 = sphi 0, %s136
    %s138 = sphi 0, %s136
    %s139 = sphi 0, %s138
    %s153 = sphi 0, %s139
    %s157 = sphi 0, %s157
    %s159 = sphi 0, %s157
    %s160 = sphi 0, %s159
    %s174 = sphi 0, %s160
    %s180 = sphi 0, %s182
    %s183 = sphi 0, %s180
    %s184 = sphi 0, %s183
    %s200 = sphi 0, %s184
  $region4: #{tpu_custom_call.1} parent=0 // loop_header_branch
    %16 = sbr.rel (%p14) target = $region8
  $region5: #{tpu_custom_call.1} parent=0 // loop_body
    %s18 = ssub.s32 %s13, 1
    %s19 = ssub.s32 %s13, 2
    %s20 = sadd.s32 %s13, 1
    %s21 = ssub.s32 %s13, %s20
    %p22 = scmp.eq.s32.totalorder %s21, 0
    %s24 = sadd.s32 %s23, 1
    %s25 = scalar_select %p22, %s23, %s24
    %p28 = pneg %p22
    %p29 = scmp.eq.s32.totalorder %s13, 7
    %p30 = por %p28, %p29
    %p31 = scmp.ne.s32.totalorder %s23, %s26
    %p32 = scmp.eq.s32.totalorder %s13, 0
    %p33 = por %p31, %p32
    %p34 = scmp.ne.s32.totalorder %s23, %s26
    %p35 = scmp.eq.s32.totalorder %s18, 7
    %p36 = por %p34, %p35
    %p37 = scmp.ne.s32.totalorder %s26, %s27
    %p38 = scmp.eq.s32.totalorder %s18, 0
    %p39 = por %p37, %p38
    %p40 = scmp.ne.s32.totalorder %s26, %s27
    %p41 = scmp.eq.s32.totalorder %s19, 7
    %p42 = por %p40, %p41
    %p44 = scmp.ne.s32.totalorder %s27, %s43
    %p45 = scmp.eq.s32.totalorder %s19, 0
    %p46 = por %p44, %p45
    %s47 = ssub.s32 %s13, %s20
    %p48 = scmp.eq.s32.totalorder %s47, 0
    %s50 = sadd.s32 %s49, 1
    %s51 = scalar_select %p48, %s49, %s50
    %p54 = pneg %p48
    %p55 = scmp.eq.s32.totalorder %s13, 7
    %p56 = por %p54, %p55
    %p57 = scmp.ne.s32.totalorder %s49, %s52
    %p58 = scmp.eq.s32.totalorder %s13, 0
    %p59 = por %p57, %p58
    %p60 = scmp.ne.s32.totalorder %s49, %s52
    %p61 = scmp.eq.s32.totalorder %s18, 7
    %p62 = por %p60, %p61
    %p63 = scmp.ne.s32.totalorder %s52, %s53
    %p64 = scmp.eq.s32.totalorder %s18, 0
    %p65 = por %p63, %p64
    %p66 = scmp.ne.s32.totalorder %s52, %s53
    %p67 = scmp.eq.s32.totalorder %s19, 7
    %p68 = por %p66, %p67
    %p70 = scmp.ne.s32.totalorder %s53, %s69
    %p71 = scmp.eq.s32.totalorder %s19, 0
    %p72 = por %p70, %p71
    %s74 = sadd.s32 %s73, 1
    %p77 = scmp.eq.s32.totalorder %s13, 7
    %p78 = scmp.ne.s32.totalorder %s73, %s75
    %p79 = scmp.eq.s32.totalorder %s13, 0
    %p80 = por %p78, %p79
    %p81 = scmp.ne.s32.totalorder %s73, %s75
    %p82 = scmp.eq.s32.totalorder %s18, 7
    %p83 = por %p81, %p82
    %p84 = scmp.ne.s32.totalorder %s75, %s76
    %p85 = scmp.eq.s32.totalorder %s18, 0
    %p86 = por %p84, %p85
    %p87 = scmp.ne.s32.totalorder %s75, %s76
    %p88 = scmp.eq.s32.totalorder %s19, 7
    %p89 = por %p87, %p88
    %p91 = scmp.ne.s32.totalorder %s76, %s90
    %p92 = scmp.eq.s32.totalorder %s19, 0
    %p93 = por %p91, %p92
    %s95 = sadd.s32 %s94, 1
    %p98 = scmp.eq.s32.totalorder %s13, 7
    %p99 = scmp.ne.s32.totalorder %s94, %s96
    %p100 = scmp.eq.s32.totalorder %s13, 0
    %p101 = por %p99, %p100
    %p102 = scmp.ne.s32.totalorder %s94, %s96
    %p103 = scmp.eq.s32.totalorder %s18, 7
    %p104 = por %p102, %p103
    %p105 = scmp.ne.s32.totalorder %s96, %s97
    %p106 = scmp.eq.s32.totalorder %s18, 0
    %p107 = por %p105, %p106
    %p108 = scmp.ne.s32.totalorder %s96, %s97
    %p109 = scmp.eq.s32.totalorder %s19, 7
    %p110 = por %p108, %p109
    %p112 = scmp.ne.s32.totalorder %s97, %s111
    %p113 = scmp.eq.s32.totalorder %s19, 0
    %p114 = por %p112, %p113
    %s116 = sadd.s32 %s115, 1
    %p119 = scmp.eq.s32.totalorder %s13, 7
    %p120 = scmp.ne.s32.totalorder %s115, %s117
    %p121 = scmp.eq.s32.totalorder %s13, 0
    %p122 = por %p120, %p121
    %p123 = scmp.ne.s32.totalorder %s115, %s117
    %p124 = scmp.eq.s32.totalorder %s18, 7
    %p125 = por %p123, %p124
    %p126 = scmp.ne.s32.totalorder %s117, %s118
    %p127 = scmp.eq.s32.totalorder %s18, 0
    %p128 = por %p126, %p127
    %p129 = scmp.ne.s32.totalorder %s117, %s118
    %p130 = scmp.eq.s32.totalorder %s19, 7
    %p131 = por %p129, %p130
    %p133 = scmp.ne.s32.totalorder %s118, %s132
    %p134 = scmp.eq.s32.totalorder %s19, 0
    %p135 = por %p133, %p134
    %s137 = sadd.s32 %s136, 1
    %p140 = scmp.eq.s32.totalorder %s13, 7
    %p141 = scmp.ne.s32.totalorder %s136, %s138
    %p142 = scmp.eq.s32.totalorder %s13, 0
    %p143 = por %p141, %p142
    %p144 = scmp.ne.s32.totalorder %s136, %s138
    %p145 = scmp.eq.s32.totalorder %s18, 7
    %p146 = por %p144, %p145
    %p147 = scmp.ne.s32.totalorder %s138, %s139
    %p148 = scmp.eq.s32.totalorder %s18, 0
    %p149 = por %p147, %p148
    %p150 = scmp.ne.s32.totalorder %s138, %s139
    %p151 = scmp.eq.s32.totalorder %s19, 7
    %p152 = por %p150, %p151
    %p154 = scmp.ne.s32.totalorder %s139, %s153
    %p155 = scmp.eq.s32.totalorder %s19, 0
    %p156 = por %p154, %p155
    %s158 = sadd.s32 %s157, 1
    %p161 = scmp.eq.s32.totalorder %s13, 7
    %p162 = scmp.ne.s32.totalorder %s157, %s159
    %p163 = scmp.eq.s32.totalorder %s13, 0
    %p164 = por %p162, %p163
    %p165 = scmp.ne.s32.totalorder %s157, %s159
    %p166 = scmp.eq.s32.totalorder %s18, 7
    %p167 = por %p165, %p166
    %p168 = scmp.ne.s32.totalorder %s159, %s160
    %p169 = scmp.eq.s32.totalorder %s18, 0
    %p170 = por %p168, %p169
    %p171 = scmp.ne.s32.totalorder %s159, %s160
    %p172 = scmp.eq.s32.totalorder %s19, 7
    %p173 = por %p171, %p172
    %p175 = scmp.ne.s32.totalorder %s160, %s174
    %p176 = scmp.eq.s32.totalorder %s19, 0
    %p177 = por %p175, %p176
    %s178 = ssub.s32 %s13, %s20
    %p179 = scmp.eq.s32.totalorder %s178, 0
    %s181 = sadd.s32 %s180, 1
    %s182 = scalar_select %p179, %s180, %s181
    %p185 = pneg %p179
    %p186 = scmp.eq.s32.totalorder %s13, 7
    %p187 = por %p185, %p186
    %p188 = scmp.ne.s32.totalorder %s180, %s183
    %p189 = scmp.eq.s32.totalorder %s13, 0
    %p190 = por %p188, %p189
    %p191 = scmp.ne.s32.totalorder %s180, %s183
    %p192 = scmp.eq.s32.totalorder %s18, 7
    %p193 = por %p191, %p192
    %p194 = scmp.ne.s32.totalorder %s183, %s184
    %p195 = scmp.eq.s32.totalorder %s18, 0
    %p196 = por %p194, %p195
    %p197 = scmp.ne.s32.totalorder %s183, %s184
    %p198 = scmp.eq.s32.totalorder %s19, 7
    %p199 = por %p197, %p198
    %p201 = scmp.ne.s32.totalorder %s184, %s200
    %p202 = scmp.eq.s32.totalorder %s19, 0
    %p203 = por %p201, %p202
    %p204 = scmp.le.s32.totalorder 1, %s13
    %p205 = scmp.lt.s32.totalorder %s13, 9
    %p206 = pnand %p204, %p205
    %p207 = pneg %p206
    // Predicated region
    $region9: #{tpu_custom_call.1} parent=5 // pred_check
      _
    $region10: #{tpu_custom_call.1} parent=5 // pred_check_branch
      %209 = sbr.rel (%p206) target = $region12
    $region11: #{tpu_custom_call.1} parent=5 // pred_region
      %s210 = ssub.s32 %s13, 1
      // Predicated region
      $region13: #{tpu_custom_call.1} parent=11 // pred_check
        %p211 = pneg %p86
      $region14: #{tpu_custom_call.1} parent=11 // pred_check_branch
        %213 = sbr.rel (%p211) target = $region16
      $region15: #{tpu_custom_call.1} parent=11 // pred_region
        _
      $region16: #{tpu_custom_call.1} parent=11 // pred_fallthru
        _
      // Predicated region
      $region17: #{tpu_custom_call.1} parent=11 // pred_check
        %p214 = pneg %p107
      $region18: #{tpu_custom_call.1} parent=11 // pred_check_branch
        %216 = sbr.rel (%p214) target = $region20
      $region19: #{tpu_custom_call.1} parent=11 // pred_region
        _
      $region20: #{tpu_custom_call.1} parent=11 // pred_fallthru
        _
      // Predicated region
      $region21: #{tpu_custom_call.1} parent=11 // pred_check
        %p217 = pneg %p128
      $region22: #{tpu_custom_call.1} parent=11 // pred_check_branch
        %219 = sbr.rel (%p217) target = $region24
      $region23: #{tpu_custom_call.1} parent=11 // pred_region
        _
      $region24: #{tpu_custom_call.1} parent=11 // pred_fallthru
        _
      // Predicated region
      $region25: #{tpu_custom_call.1} parent=11 // pred_check
        %p220 = pneg %p149
      $region26: #{tpu_custom_call.1} parent=11 // pred_check_branch
        %222 = sbr.rel (%p220) target = $region28
      $region27: #{tpu_custom_call.1} parent=11 // pred_region
        _
      $region28: #{tpu_custom_call.1} parent=11 // pred_fallthru
        _
      // Predicated region
      $region29: #{tpu_custom_call.1} parent=11 // pred_check
        %p223 = pneg %p170
      $region30: #{tpu_custom_call.1} parent=11 // pred_check_branch
        %225 = sbr.rel (%p223) target = $region32
      $region31: #{tpu_custom_call.1} parent=11 // pred_region
        _
      $region32: #{tpu_custom_call.1} parent=11 // pred_fallthru
        _
    $region12: #{tpu_custom_call.1} parent=5 // pred_fallthru
      _
    %p226 = scmp.lt.s32.totalorder %s13, 8
    // Predicated region
    $region33: #{tpu_custom_call.1} parent=5 // pred_check
      %p227 = pneg %p226
    $region34: #{tpu_custom_call.1} parent=5 // pred_check_branch
      %229 = sbr.rel (%p227) target = $region36
    $region35: #{tpu_custom_call.1} parent=5 // pred_region
      // Predicated region
      $region37: #{tpu_custom_call.1} parent=35 // pred_check
        %p230 = pneg %p33
      $region38: #{tpu_custom_call.1} parent=35 // pred_check_branch
        %232 = sbr.rel (%p230) target = $region40
      $region39: #{tpu_custom_call.1} parent=35 // pred_region
        %s233 = smul.u32 4, %s13
        %p234 = scmp.lt.s32.totalorder %s233, 31
        %s235 = scalar_select %p234, %s233, 31
        %s236 = smul.addr %s235, 8
        %s237 = scalar_lea.vmem %s0, %s236
        %s238 = smul.u32 4, %s13
      $region40: #{tpu_custom_call.1} parent=35 // pred_fallthru
        _
      // Predicated region
      $region41: #{tpu_custom_call.1} parent=35 // pred_check
        %p239 = pneg %p59
      $region42: #{tpu_custom_call.1} parent=35 // pred_check_branch
        %241 = sbr.rel (%p239) target = $region44
      $region43: #{tpu_custom_call.1} parent=35 // pred_region
        %s242 = smul.u32 4, %s13
        %p243 = scmp.lt.s32.totalorder %s242, 31
        %s244 = scalar_select %p243, %s242, 31
        %s245 = smul.addr %s244, 8
        %s246 = scalar_lea.vmem %s1, %s245
        %s247 = smul.u32 4, %s13
      $region44: #{tpu_custom_call.1} parent=35 // pred_fallthru
        _
    $region36: #{tpu_custom_call.1} parent=5 // pred_fallthru
      _
    %p248 = scmp.le.s32.totalorder 1, %s13
    %p249 = scmp.lt.s32.totalorder %s13, 9
    %p250 = pnand %p248, %p249
    %p251 = pneg %p250
    // Predicated region
    $region45: #{tpu_custom_call.1} parent=5 // pred_check
      _
    $region46: #{tpu_custom_call.1} parent=5 // pred_check_branch
      %253 = sbr.rel (%p250) target = $region48
    $region47: #{tpu_custom_call.1} parent=5 // pred_region
      %s254 = ssub.s32 %s13, 1
      %s255 = smul.u32 4, %s18
      %p256 = scmp.lt.s32.totalorder %s255, 31
      %s257 = scalar_select %p256, %s255, 31
      %s258 = smul.addr %s257, 8
      %s259 = scalar_lea.vmem %s0, %s258
      %p260 = pneg %p39
      %p261 = pneg %p36
      %s262 = smul.u32 4, %s18
      %p263 = scmp.lt.s32.totalorder %s262, 31
      %s264 = scalar_select %p263, %s262, 31
      %s265 = smul.addr %s264, 8
      %s266 = scalar_lea.vmem %s1, %s265
      %p267 = pneg %p65
      %p268 = pneg %p62
      %p269 = pneg %p86
      %p270 = pneg %p83
      %p271 = pneg %p107
      %p272 = pneg %p104
      %p273 = pneg %p128
      %p274 = pneg %p125
      %p275 = pneg %p149
      %p276 = pneg %p146
      %p277 = pneg %p170
      %p278 = pneg %p167
      %p279 = pneg %p196
      %p280 = pneg %p193
      %s281 = smul.u32 4, %s18
      %p282 = scmp.lt.s32.totalorder %s281, 31
      %s283 = scalar_select %p282, %s281, 31
      %s284 = smul.addr %s283, 8
      %s285 = scalar_lea.vmem %s7, %s284
      %s286 = smul.u32 4, %s18
      %p287 = scmp.lt.s32.totalorder %s286, 31
      %s288 = scalar_select %p287, %s286, 31
      %s289 = smul.addr %s288, 8
      %s290 = scalar_lea.vmem %s0, %s289
      %s291 = smul.u32 4, %s18
      %s292 = smul.u32 4, %s18
      %p293 = scmp.lt.s32.totalorder %s292, 31
      %s294 = scalar_select %p293, %s292, 31
      %s295 = smul.addr %s294, 8
      %s296 = scalar_lea.vmem %s1, %s295
      %s297 = smul.u32 4, %s18
      %s298 = smul.u32 4, %s18
      %p299 = scmp.lt.s32.totalorder %s298, 31
      %s300 = scalar_select %p299, %s298, 31
      %s301 = smul.addr %s300, 8
      %s302 = scalar_lea.vmem %s7, %s301
      %s303 = smul.u32 4, %s18
      %v304 = vld [vmem:[%s290] sm:$0xff]
      %v305 = vld [vmem:[%s290 + $0x8] sm:$0xff]
      %v306 = vld [vmem:[%s290 + $0x10] sm:$0xff]
      %v307 = vld [vmem:[%s290 + $0x18] sm:$0xff]
      %v308 = vld [vmem:[%s296] sm:$0xff]
      %v309 = vld [vmem:[%s296 + $0x8] sm:$0xff]
      %v310 = vld [vmem:[%s296 + $0x10] sm:$0xff]
      %v311 = vld [vmem:[%s296 + $0x18] sm:$0xff]
      %v312 = vld [vmem:[%s2] sm:$0xff]
      %v313 = vld [vmem:[%s2 + $0x8] sm:$0xff]
      %v314 = vld [vmem:[%s3] sm:$0xff]
      %v315 = vld [vmem:[%s3 + $0x8] sm:$0xff]
      %v316 = vld [vmem:[%s3 + $0x10] sm:$0xff]
      %vm317 = vcmask 195584
      %v319 = vsel %vm317, %v308, 0
      %v322 = vsel %vm317, %v309, 0
      %v325 = vsel %vm317, %v310, 0
      %v328 = vsel %vm317, %v311, 0
      %330 = vmatprep.subr.mxu0 0.0
      %331 = vmatpush1.msra.mxu0 0.0
      %332 = vmatprep.subr.mxu0 0.0
      %333 = vmatpush1.msra.mxu0 0.0
      %334 = vmatprep.subr.mxu0 0.0
      %335 = vmatpush1.msra.mxu0 0.0
      %336 = vmatprep.subr.mxu0 0.0
      %337 = vmatpush1.msra.mxu0 0.0
      %338 = vmatprep.subr.mxu0 0.0
      %339 = vmatpush1.msra.mxu0 0.0
      %340 = vmatprep.subr.mxu0 0.0
      %341 = vmatpush1.msra.mxu0 0.0
      %342 = vmatprep.subr.mxu0 0.0
      %343 = vmatpush1.msra.mxu0 0.0
      %344 = vmatprep.subr.mxu0 0.0
      %345 = vmatpush1.msra.mxu0 0.0
      %346 = vmatprep.subr.mxu0 0.0
      %347 = vmatpush1.msra.mxu0 0.0
      %348 = vmatprep.subr.mxu0 0.0
      %349 = vmatpush1.msra.mxu0 0.0
      %350 = vmatprep.subr.mxu0 0.0
      %351 = vmatpush1.msra.mxu0 0.0
      %352 = vmatprep.subr.mxu0 0.0
      %353 = vmatpush1.msra.mxu0 0.0
      %354 = vmatprep.subr.mxu0 0.0
      %355 = vmatpush1.msra.mxu0 0.0
      %356 = vmatprep.subr.mxu0 0.0
      %357 = vmatpush1.msra.mxu0 %v316
      %358 = vmatprep.subr.mxu0 0.0
      %359 = vmatpush1.msra.mxu0 %v315
      %360 = vmatprep.subr.mxu0 0.0
      %361 = vmatpush1.msra.mxu0 %v314
      %362 = vmatprep.subr.mxu0 0.0
      %363 = vmatpush2.msra.mxu0 0.0
      %364 = vmatprep.subr.mxu0 0.0
      %365 = vmatpush2.msra.mxu0 0.0
      %366 = vmatprep.subr.mxu0 0.0
      %367 = vmatpush2.msra.mxu0 0.0
      %368 = vmatprep.subr.mxu0 0.0
      %369 = vmatpush2.msra.mxu0 0.0
      %370 = vmatprep.subr.mxu0 0.0
      %371 = vmatpush2.msra.mxu0 0.0
      %372 = vmatprep.subr.mxu0 0.0
      %373 = vmatpush2.msra.mxu0 0.0
      %374 = vmatprep.subr.mxu0 0.0
      %375 = vmatpush2.msra.mxu0 0.0
      %376 = vmatprep.subr.mxu0 0.0
      %377 = vmatpush2.msra.mxu0 0.0
      %378 = vmatprep.subr.mxu0 0.0
      %379 = vmatpush2.msra.mxu0 0.0
      %380 = vmatprep.subr.mxu0 0.0
      %381 = vmatpush2.msra.mxu0 0.0
      %382 = vmatprep.subr.mxu0 0.0
      %383 = vmatpush2.msra.mxu0 0.0
      %384 = vmatprep.subr.mxu0 0.0
      %385 = vmatpush2.msra.mxu0 0.0
      %386 = vmatprep.subr.mxu0 0.0
      %387 = vmatpush2.msra.mxu0 0.0
      %388 = vmatprep.subr.mxu0 0.0
      %389 = vmatpush2.msra.mxu0 0.0
      %390 = vmatprep.subr.mxu0 0.0
      %391 = vmatpush2.msra.mxu0 0.0
      %392 = vmatprep.subr.mxu0 0.0
      %393 = vmatpush2.msra.mxu0 0.0
      %394 = vmatprep.mubr.f32.mxu0 0.0
      %395 = vmatmul.mubr.f32.gmra.mxu0 %v319
      %v396 = vpop.f32.mrf.mxu0
      %v397 = vadd.f32 0.0, %v396
      %v398 = vpop.f32.mrf.mxu0
      %399 = vmatprep.mubr.f32.mxu0 0.0
      %400 = vmatmul.mubr.f32.gmra.mxu0 %v322
      %v401 = vpop.f32.mrf.mxu0
      %v402 = vadd.f32 0.0, %v401
      %v403 = vpop.f32.mrf.mxu0
      %404 = vmatprep.mubr.f32.mxu0 0.0
      %405 = vmatmul.mubr.f32.gmra.mxu0 %v325
      %v406 = vpop.f32.mrf.mxu0
      %v407 = vadd.f32 0.0, %v406
      %v408 = vpop.f32.mrf.mxu0
      %409 = vmatprep.mubr.f32.mxu0 0.0
      %410 = vmatmul.mubr.f32.gmra.mxu0 %v328
      %v411 = vpop.f32.mrf.mxu0
      %v412 = vadd.f32 0.0, %v411
      %v413 = vpop.f32.mrf.mxu0
      %414 = vdwg.mxu0
      %vm415 = vcmask 130048
      %v417 = vsel %vm415, %v304, 0
      %v420 = vsel %vm415, %v305, 0
      %v423 = vsel %vm415, %v306, 0
      %v426 = vsel %vm415, %v307, 0
      %428 = vmatprep.subr.mxu0 0.0
      %429 = vmatpush1.msra.mxu0 0.0
      %430 = vmatprep.subr.mxu0 0.0
      %431 = vmatpush1.msra.mxu0 0.0
      %432 = vmatprep.subr.mxu0 0.0
      %433 = vmatpush1.msra.mxu0 0.0
      %434 = vmatprep.subr.mxu0 0.0
      %435 = vmatpush1.msra.mxu0 0.0
      %436 = vmatprep.subr.mxu0 0.0
      %437 = vmatpush1.msra.mxu0 0.0
      %438 = vmatprep.subr.mxu0 0.0
      %439 = vmatpush1.msra.mxu0 0.0
      %440 = vmatprep.subr.mxu0 0.0
      %441 = vmatpush1.msra.mxu0 0.0
      %442 = vmatprep.subr.mxu0 0.0
      %443 = vmatpush1.msra.mxu0 0.0
      %444 = vmatprep.subr.mxu0 0.0
      %445 = vmatpush1.msra.mxu0 0.0
      %446 = vmatprep.subr.mxu0 0.0
      %447 = vmatpush1.msra.mxu0 0.0
      %448 = vmatprep.subr.mxu0 0.0
      %449 = vmatpush1.msra.mxu0 0.0
      %450 = vmatprep.subr.mxu0 0.0
      %451 = vmatpush1.msra.mxu0 0.0
      %452 = vmatprep.subr.mxu0 0.0
      %453 = vmatpush1.msra.mxu0 0.0
      %454 = vmatprep.subr.mxu0 0.0
      %455 = vmatpush1.msra.mxu0 0.0
      %456 = vmatprep.subr.mxu0 0.0
      %457 = vmatpush1.msra.mxu0 %v313
      %458 = vmatprep.subr.mxu0 0.0
      %459 = vmatpush1.msra.mxu0 %v312
      %460 = vmatprep.subr.mxu0 0.0
      %461 = vmatpush2.msra.mxu0 0.0
      %462 = vmatprep.subr.mxu0 0.0
      %463 = vmatpush2.msra.mxu0 0.0
      %464 = vmatprep.subr.mxu0 0.0
      %465 = vmatpush2.msra.mxu0 0.0
      %466 = vmatprep.subr.mxu0 0.0
      %467 = vmatpush2.msra.mxu0 0.0
      %468 = vmatprep.subr.mxu0 0.0
      %469 = vmatpush2.msra.mxu0 0.0
      %470 = vmatprep.subr.mxu0 0.0
      %471 = vmatpush2.msra.mxu0 0.0
      %472 = vmatprep.subr.mxu0 0.0
      %473 = vmatpush2.msra.mxu0 0.0
      %474 = vmatprep.subr.mxu0 0.0
      %475 = vmatpush2.msra.mxu0 0.0
      %476 = vmatprep.subr.mxu0 0.0
      %477 = vmatpush2.msra.mxu0 0.0
      %478 = vmatprep.subr.mxu0 0.0
      %479 = vmatpush2.msra.mxu0 0.0
      %480 = vmatprep.subr.mxu0 0.0
      %481 = vmatpush2.msra.mxu0 0.0
      %482 = vmatprep.subr.mxu0 0.0
      %483 = vmatpush2.msra.mxu0 0.0
      %484 = vmatprep.subr.mxu0 0.0
      %485 = vmatpush2.msra.mxu0 0.0
      %486 = vmatprep.subr.mxu0 0.0
      %487 = vmatpush2.msra.mxu0 0.0
      %488 = vmatprep.subr.mxu0 0.0
      %489 = vmatpush2.msra.mxu0 0.0
      %490 = vmatprep.subr.mxu0 0.0
      %491 = vmatpush2.msra.mxu0 0.0
      %492 = vmatprep.mubr.f32.mxu0 0.0
      %493 = vmatmul.mubr.f32.gmra.mxu0 %v417
      %v494 = vpop.f32.mrf.mxu0
      %v495 = vadd.f32 %v397, %v494
      %v496 = vpop.f32.mrf.mxu0
      %497 = vmatprep.mubr.f32.mxu0 0.0
      %498 = vmatmul.mubr.f32.gmra.mxu0 %v420
      %v499 = vpop.f32.mrf.mxu0
      %v500 = vadd.f32 %v402, %v499
      %v501 = vpop.f32.mrf.mxu0
      %502 = vmatprep.mubr.f32.mxu0 0.0
      %503 = vmatmul.mubr.f32.gmra.mxu0 %v423
      %v504 = vpop.f32.mrf.mxu0
      %v505 = vadd.f32 %v407, %v504
      %v506 = vpop.f32.mrf.mxu0
      %507 = vmatprep.mubr.f32.mxu0 0.0
      %508 = vmatmul.mubr.f32.gmra.mxu0 %v426
      %v509 = vpop.f32.mrf.mxu0
      %v510 = vadd.f32 %v412, %v509
      %v511 = vpop.f32.mrf.mxu0
      %512 = vdwg.mxu0
      %v513 = vld [vmem:[%s4] sm:$0x1]
      %v515 = vlaneseq
      %v516 = vshrl.u32 %v515, 7
      %v517 = vsub.s32 0, %v516
      %v518 = vrot.slane %v513, %v517
      %v520 = vadd.f32 %v495, %v518
      %v521 = vadd.f32 %v500, %v518
      %v522 = vadd.f32 %v505, %v518
      %v523 = vadd.f32 %v510, %v518
      %v524 = vmax.f32 %v520, 0.0
      %v525 = vmax.f32 %v521, 0.0
      %v526 = vmax.f32 %v522, 0.0
      %v527 = vmax.f32 %v523, 0.0
      %v528 = vld [vmem:[%s5] sm:$0xff]
      %v529 = vld [vmem:[%s5 + $0x8] sm:$0xff]
      %v530 = vld [vmem:[%s5 + $0x10] sm:$0xff]
      %v531 = vld [vmem:[%s5 + $0x18] sm:$0xff]
      %v532 = vld [vmem:[%s6] sm:$0x1]
      %v534 = vlaneseq
      %v535 = vshrl.u32 %v534, 7
      %v536 = vsub.s32 0, %v535
      %v537 = vrot.slane %v532, %v536
      %vm539 = vcmask 261120
      %v541 = vsel %vm539, %v524, 0
      %v544 = vsel %vm539, %v525, 0
      %v547 = vsel %vm539, %v526, 0
      %v550 = vsel %vm539, %v527, 0
      %552 = vmatprep.subr.mxu0 0.0
      %553 = vmatpush1.msra.mxu0 0.0
      %554 = vmatprep.subr.mxu0 0.0
      %555 = vmatpush1.msra.mxu0 0.0
      %556 = vmatprep.subr.mxu0 0.0
      %557 = vmatpush1.msra.mxu0 0.0
      %558 = vmatprep.subr.mxu0 0.0
      %559 = vmatpush1.msra.mxu0 0.0
      %560 = vmatprep.subr.mxu0 0.0
      %561 = vmatpush1.msra.mxu0 0.0
      %562 = vmatprep.subr.mxu0 0.0
      %563 = vmatpush1.msra.mxu0 0.0
      %564 = vmatprep.subr.mxu0 0.0
      %565 = vmatpush1.msra.mxu0 0.0
      %566 = vmatprep.subr.mxu0 0.0
      %567 = vmatpush1.msra.mxu0 0.0
      %568 = vmatprep.subr.mxu0 0.0
      %569 = vmatpush1.msra.mxu0 0.0
      %570 = vmatprep.subr.mxu0 0.0
      %571 = vmatpush1.msra.mxu0 0.0
      %572 = vmatprep.subr.mxu0 0.0
      %573 = vmatpush1.msra.mxu0 0.0
      %574 = vmatprep.subr.mxu0 0.0
      %575 = vmatpush1.msra.mxu0 0.0
      %576 = vmatprep.subr.mxu0 0.0
      %577 = vmatpush1.msra.mxu0 %v531
      %578 = vmatprep.subr.mxu0 0.0
      %579 = vmatpush1.msra.mxu0 %v530
      %580 = vmatprep.subr.mxu0 0.0
      %581 = vmatpush1.msra.mxu0 %v529
      %582 = vmatprep.subr.mxu0 0.0
      %583 = vmatpush1.msra.mxu0 %v528
      %584 = vmatprep.subr.mxu0 0.0
      %585 = vmatpush2.msra.mxu0 0.0
      %586 = vmatprep.subr.mxu0 0.0
      %587 = vmatpush2.msra.mxu0 0.0
      %588 = vmatprep.subr.mxu0 0.0
      %589 = vmatpush2.msra.mxu0 0.0
      %590 = vmatprep.subr.mxu0 0.0
      %591 = vmatpush2.msra.mxu0 0.0
      %592 = vmatprep.subr.mxu0 0.0
      %593 = vmatpush2.msra.mxu0 0.0
      %594 = vmatprep.subr.mxu0 0.0
      %595 = vmatpush2.msra.mxu0 0.0
      %596 = vmatprep.subr.mxu0 0.0
      %597 = vmatpush2.msra.mxu0 0.0
      %598 = vmatprep.subr.mxu0 0.0
      %599 = vmatpush2.msra.mxu0 0.0
      %600 = vmatprep.subr.mxu0 0.0
      %601 = vmatpush2.msra.mxu0 0.0
      %602 = vmatprep.subr.mxu0 0.0
      %603 = vmatpush2.msra.mxu0 0.0
      %604 = vmatprep.subr.mxu0 0.0
      %605 = vmatpush2.msra.mxu0 0.0
      %606 = vmatprep.subr.mxu0 0.0
      %607 = vmatpush2.msra.mxu0 0.0
      %608 = vmatprep.subr.mxu0 0.0
      %609 = vmatpush2.msra.mxu0 0.0
      %610 = vmatprep.subr.mxu0 0.0
      %611 = vmatpush2.msra.mxu0 0.0
      %612 = vmatprep.subr.mxu0 0.0
      %613 = vmatpush2.msra.mxu0 0.0
      %614 = vmatprep.subr.mxu0 0.0
      %615 = vmatpush2.msra.mxu0 0.0
      %616 = vmatprep.mubr.f32.mxu0 0.0
      %617 = vmatmul.mubr.f32.gmra.mxu0 %v541
      %v618 = vpop.f32.mrf.mxu0
      %v619 = vadd.f32 %v537, %v618
      %v620 = vpop.f32.mrf.mxu0
      %621 = vmatprep.mubr.f32.mxu0 0.0
      %622 = vmatmul.mubr.f32.gmra.mxu0 %v544
      %v623 = vpop.f32.mrf.mxu0
      %v624 = vadd.f32 %v537, %v623
      %v625 = vpop.f32.mrf.mxu0
      %626 = vmatprep.mubr.f32.mxu0 0.0
      %627 = vmatmul.mubr.f32.gmra.mxu0 %v547
      %v628 = vpop.f32.mrf.mxu0
      %v629 = vadd.f32 %v537, %v628
      %v630 = vpop.f32.mrf.mxu0
      %631 = vmatprep.mubr.f32.mxu0 0.0
      %632 = vmatmul.mubr.f32.gmra.mxu0 %v550
      %v633 = vpop.f32.mrf.mxu0
      %v634 = vadd.f32 %v537, %v633
      %v635 = vpop.f32.mrf.mxu0
      %636 = vdwg.mxu0
      %637 = vst.msk [vmem:[%s302] sm:$0xff] %vm415, %v619
      %638 = vst.msk [vmem:[%s302 + $0x8] sm:$0xff] %vm415, %v624
      %639 = vst.msk [vmem:[%s302 + $0x10] sm:$0xff] %vm415, %v629
      %640 = vst.msk [vmem:[%s302 + $0x18] sm:$0xff] %vm415, %v634
      %s641 = smul.u32 4, %s18
      %p642 = scmp.lt.s32.totalorder %s641, 31
      %s643 = scalar_select %p642, %s641, 31
      %s644 = smul.addr %s643, 8
      %s645 = scalar_lea.vmem %s7, %s644
      // Predicated region
      $region49: #{tpu_custom_call.1} parent=47 // pred_check
        %p646 = pneg %p193
      $region50: #{tpu_custom_call.1} parent=47 // pred_check_branch
        %648 = sbr.rel (%p646) target = $region52
      $region51: #{tpu_custom_call.1} parent=47 // pred_region
        %s649 = smul.u32 4, %s18
      $region52: #{tpu_custom_call.1} parent=47 // pred_fallthru
        _
    $region48: #{tpu_custom_call.1} parent=5 // pred_fallthru
      _
    %p650 = scmp.le.s32.totalorder 2, %s13
    // Predicated region
    $region53: #{tpu_custom_call.1} parent=5 // pred_check
      %p651 = pneg %p650
    $region54: #{tpu_custom_call.1} parent=5 // pred_check_branch
      %653 = sbr.rel (%p651) target = $region56
    $region55: #{tpu_custom_call.1} parent=5 // pred_region
      %s654 = ssub.s32 %s13, 2
      // Predicated region
      $region57: #{tpu_custom_call.1} parent=55 // pred_check
        %p655 = pneg %p199
      $region58: #{tpu_custom_call.1} parent=55 // pred_check_branch
        %657 = sbr.rel (%p655) target = $region60
      $region59: #{tpu_custom_call.1} parent=55 // pred_region
        %s658 = smul.u32 4, %s19
        %p659 = scmp.lt.s32.totalorder %s658, 31
        %s660 = scalar_select %p659, %s658, 31
        %s661 = smul.addr %s660, 8
        %s662 = scalar_lea.vmem %s7, %s661
      $region60: #{tpu_custom_call.1} parent=55 // pred_fallthru
        _
    $region56: #{tpu_custom_call.1} parent=5 // pred_fallthru
      _
  $region6: #{tpu_custom_call.1} parent=0 // loop_footer
    %s17 = sadd.s32 1, %s13
  $region7: #{tpu_custom_call.1} parent=0 // loop_footer_branch
    %12 = sbr.rel target = $region3
  $region8: #{tpu_custom_call.1} parent=0 // loop_exit
    _

</llo_original>
